<compile_context>
chip_gen: v6e
topology: v6e:2x2x1
jax: 0.10.0
libtpu: 0.0.40
codegen_flags: <defaults>
</compile_context>

<pallas_src>
import jax
import jax.numpy as jnp
from jax.experimental import pallas as pl
from jax.experimental.pallas import tpu as pltpu

BN_EPS = 1e-5


def _fused_a_kernel(ab_ref, p1_ref, p2_ref, out_ref):
    ab = ab_ref[...]                      # (N, 8) = [a | b]

    # Packed parameter slab 1: weights + fused bias + folded BN affine.
    w12    = p1_ref[0:8, :]               # (8, 4)  = [w1^T ; w2^T]
    bias12 = p1_ref[8:9, :]               # (1, 4)  = b1 + b2
    gamma  = p1_ref[9:10, :]              # (1, 4)  = bn_gamma * conv_w
    beta   = p1_ref[10:11, :]             # (1, 4)  = bn_beta * conv_w + conv_b

    # h = fc1(a) + fc2(b)   (single fused matmul, K = 8)
    h = jnp.dot(ab, w12, preferred_element_type=jnp.float32) + bias12

    # BatchNorm1d, training-mode batch statistics (biased variance).
    n = h.shape[0]
    inv_n = 1.0 / n
    mean = jnp.sum(h, axis=0, keepdims=True) * inv_n
    centered = h - mean
    var = jnp.sum(centered * centered, axis=0, keepdims=True) * inv_n
    # gamma/beta already carry the folded Conv2d(1,1,1) scalar affine.
    h = centered * jax.lax.rsqrt(var + BN_EPS) * gamma + beta

    # Fused fca / fcb heads: single (N,4)x(4,2) matmul, lane-dense output.
    whead = p2_ref[0:4, :]                # (4, 2) = [wa^T | wb^T]
    bhead = p2_ref[4:5, :]                # (1, 2) = [ba | bb]
    out_ref[...] = jnp.dot(h, whead, preferred_element_type=jnp.float32) + bhead


def forward_a(a, b, params):
    batch = a.shape[0]

    # Conv2d(1,1,1) assumptions: single scalar weight / bias.
    assert params["cw"].shape == (1, 1) and params["cb"].shape == (1, 1)

    # --- trace-time packing (runs once in XLA, outside the kernel) ---------
    ab = jnp.concatenate([a, b], axis=1)                       # (N, 8)

    cw = params["cw"][0, 0]
    cb = params["cb"][0, 0]
    gamma_f = params["gamma"] * cw                             # (1, 4)
    beta_f = params["beta"] * cw + cb                          # (1, 4)

    p1 = jnp.concatenate(
        [params["w1t"], params["w2t"],                         # (8, 4)
         params["b1"] + params["b2"],                          # (1, 4)
         gamma_f, beta_f],                                     # (2, 4)
        axis=0)                                                # (11, 4)

    p2 = jnp.concatenate(
        [jnp.concatenate([params["wat"], params["wbt"]], axis=1),   # (4, 2)
         jnp.concatenate([params["ba"], params["bb"]], axis=1)],    # (1, 2)
        axis=0)                                                # (5, 2)

    vmem = pl.BlockSpec(memory_space=pltpu.MemorySpace.VMEM)
    out = pl.pallas_call(
        _fused_a_kernel,
        out_shape=jax.ShapeDtypeStruct((batch, 2), jnp.float32),
        in_specs=[vmem, vmem, vmem],
        out_specs=vmem,
    )(ab, p1, p2)

    # Split the lane-dense (N, 2) output back into the two heads.
    return out[:, 0:1], out[:, 1:2]


def init_params(key):
    ks = jax.random.split(key, 10)
    f32 = jnp.float32
    # nn.Linear(4, 4) weights are (out, in); store transposed as (in, out).
    w1 = jax.random.normal(ks[0], (4, 4), f32) * 0.1
    b1 = jax.random.normal(ks[1], (1, 4), f32) * 0.1
    w2 = jax.random.normal(ks[2], (4, 4), f32) * 0.1
    b2 = jax.random.normal(ks[3], (1, 4), f32) * 0.1
    # BatchNorm1d(4) defaults.
    gamma = jnp.ones((1, 4), f32)
    beta = jnp.zeros((1, 4), f32)
    # Conv2d(1, 1, 1): single scalar weight + single scalar bias.
    cw = jax.random.normal(ks[4], (1, 1), f32) * 0.1 + 1.0
    cb = jax.random.normal(ks[5], (1, 1), f32) * 0.1
    # nn.Linear(4, 1) heads, stored transposed as (4, 1).
    wa = jax.random.normal(ks[6], (4, 1), f32) * 0.1
    ba = jax.random.normal(ks[7], (1, 1), f32) * 0.1
    wb = jax.random.normal(ks[8], (4, 1), f32) * 0.1
    bb = jax.random.normal(ks[9], (1, 1), f32) * 0.1
    return dict(w1t=w1, b1=b1, w2t=w2, b2=b2, gamma=gamma, beta=beta,
                cw=cw, cb=cb, wat=wa, ba=ba, wbt=wb, bb=bb)


def reference_a(a, b, p):
    """Pure-JAX reference of the PyTorch forward (training-mode BN)."""
    h = a @ p["w1t"] + p["b1"] + b @ p["w2t"] + p["b2"]
    mean = jnp.mean(h, axis=0, keepdims=True)
    var = jnp.mean((h - mean) ** 2, axis=0, keepdims=True)   # biased, as PyTorch normalizes
    h = (h - mean) / jnp.sqrt(var + BN_EPS) * p["gamma"] + p["beta"]
    h = h * p["cw"][0, 0] + p["cb"][0, 0]
    return h @ p["wat"] + p["ba"], h @ p["wbt"] + p["bb"]


if __name__ == "__main__":
    key = jax.random.PRNGKey(0)
    ka, kb, kp = jax.random.split(key, 3)
    # Module's example input: two (4, 4) tensors.
    a = jax.random.normal(ka, (4, 4), jnp.float32)
    b = jax.random.normal(kb, (4, 4), jnp.float32)
    params = init_params(kp)

    out_a, out_b = forward_a(a, b, params)
    jax.block_until_ready((out_a, out_b))

    ref_a, ref_b = reference_a(a, b, params)
    assert out_a.shape == (4, 1) and out_b.shape == (4, 1)
    assert jnp.allclose(out_a, ref_a, atol=1e-4, rtol=1e-4)
    assert jnp.allclose(out_b, ref_b, atol=1e-4, rtol=1e-4)

    print("KERNEL_OK")
</pallas_src>

<mosaic_0001>
module attributes {stable_mosaic.version = 11 : i64} {
  func.func @_fused_a_kernel(%arg0: memref<4x8xf32, #tpu.memory_space<vmem>>, %arg1: memref<11x4xf32, #tpu.memory_space<vmem>>, %arg2: memref<5x2xf32, #tpu.memory_space<vmem>>, %arg3: memref<4x2xf32, #tpu.memory_space<vmem>>) attributes {dimension_semantics = [], scalar_prefetch = 0 : i64, scratch_operands = 0 : i64, tpu.core_type = #tpu.core_type<tc>} {
    %c0 = arith.constant 0 : index
    %c0_0 = arith.constant 0 : index
    %0 = vector.load %arg0[%c0, %c0_0] : memref<4x8xf32, #tpu.memory_space<vmem>>, vector<4x8xf32>
    %c0_1 = arith.constant 0 : index
    %c0_2 = arith.constant 0 : index
    %1 = vector.load %arg1[%c0_1, %c0_2] : memref<11x4xf32, #tpu.memory_space<vmem>>, vector<8x4xf32>
    %c8 = arith.constant 8 : index
    %c0_3 = arith.constant 0 : index
    %2 = vector.load %arg1[%c8, %c0_3] : memref<11x4xf32, #tpu.memory_space<vmem>>, vector<1x4xf32>
    %c9 = arith.constant 9 : index
    %c0_4 = arith.constant 0 : index
    %3 = vector.load %arg1[%c9, %c0_4] : memref<11x4xf32, #tpu.memory_space<vmem>>, vector<1x4xf32>
    %c10 = arith.constant 10 : index
    %c0_5 = arith.constant 0 : index
    %4 = vector.load %arg1[%c10, %c0_5] : memref<11x4xf32, #tpu.memory_space<vmem>>, vector<1x4xf32>
    %cst = arith.constant dense<0.000000e+00> : vector<4x4xf32>
    %5 = tpu.matmul %0, %1, %cst {dimension_numbers = #tpu.dot_dimension_numbers<[1], [0], [0], [1], [0, 0, 1, 1], [], []>} : vector<4x8xf32>, vector<8x4xf32>, vector<4x4xf32> -> vector<4x4xf32>
    %6 = vector.broadcast %2 : vector<1x4xf32> to vector<4x4xf32>
    %7 = arith.addf %5, %6 : vector<4x4xf32>
    %cst_6 = arith.constant dense<0.000000e+00> : vector<4xf32>
    %8 = vector.multi_reduction <add>, %7, %cst_6 [0] : vector<4x4xf32> to vector<4xf32>
    %9 = vector.shape_cast %8 : vector<4xf32> to vector<1x4xf32>
    %cst_7 = arith.constant 2.500000e-01 : f32
    %10 = vector.broadcast %cst_7 : f32 to vector<1x4xf32>
    %11 = arith.mulf %9, %10 : vector<1x4xf32>
    %12 = vector.broadcast %11 : vector<1x4xf32> to vector<4x4xf32>
    %13 = arith.subf %7, %12 : vector<4x4xf32>
    %14 = arith.mulf %13, %13 : vector<4x4xf32>
    %cst_8 = arith.constant dense<0.000000e+00> : vector<4xf32>
    %15 = vector.multi_reduction <add>, %14, %cst_8 [0] : vector<4x4xf32> to vector<4xf32>
    %16 = vector.shape_cast %15 : vector<4xf32> to vector<1x4xf32>
    %cst_9 = arith.constant 2.500000e-01 : f32
    %17 = vector.broadcast %cst_9 : f32 to vector<1x4xf32>
    %18 = arith.mulf %16, %17 : vector<1x4xf32>
    %cst_10 = arith.constant 9.99999974E-6 : f32
    %19 = vector.broadcast %cst_10 : f32 to vector<1x4xf32>
    %20 = arith.addf %18, %19 : vector<1x4xf32>
    %21 = math.rsqrt %20 : vector<1x4xf32>
    %22 = vector.broadcast %21 : vector<1x4xf32> to vector<4x4xf32>
    %23 = arith.mulf %13, %22 : vector<4x4xf32>
    %24 = vector.broadcast %3 : vector<1x4xf32> to vector<4x4xf32>
    %25 = arith.mulf %23, %24 : vector<4x4xf32>
    %26 = vector.broadcast %4 : vector<1x4xf32> to vector<4x4xf32>
    %27 = arith.addf %25, %26 : vector<4x4xf32>
    %c0_11 = arith.constant 0 : index
    %c0_12 = arith.constant 0 : index
    %28 = vector.load %arg2[%c0_11, %c0_12] : memref<5x2xf32, #tpu.memory_space<vmem>>, vector<4x2xf32>
    %c4 = arith.constant 4 : index
    %c0_13 = arith.constant 0 : index
    %29 = vector.load %arg2[%c4, %c0_13] : memref<5x2xf32, #tpu.memory_space<vmem>>, vector<1x2xf32>
    %cst_14 = arith.constant dense<0.000000e+00> : vector<4x2xf32>
    %30 = tpu.matmul %27, %28, %cst_14 {dimension_numbers = #tpu.dot_dimension_numbers<[1], [0], [0], [1], [0, 0, 1, 1], [], []>} : vector<4x4xf32>, vector<4x2xf32>, vector<4x2xf32> -> vector<4x2xf32>
    %31 = vector.broadcast %29 : vector<1x2xf32> to vector<4x2xf32>
    %32 = arith.addf %30, %31 : vector<4x2xf32>
    %c0_15 = arith.constant 0 : index
    %c0_16 = arith.constant 0 : index
    %33 = vector.load %arg3[%c0_15, %c0_16] : memref<4x2xf32, #tpu.memory_space<vmem>>, vector<4x2xf32>
    tpu.vector_store %arg3[%c0_15, %c0_16], %32 {strides = array<i32>} : memref<4x2xf32, #tpu.memory_space<vmem>>, vector<4x2xf32>,
    return
  }
}

</mosaic_0001>

<llo_original>
// kernel: tpu_custom_call.1
$region0: #{tpu_custom_call.1}
  #allocation0 [shape = 'u32[]', space=smem, size = 0x4, offset = 0x4, fixed_abs, tag = 'smem constant byte address 0x4 - core index']
  #allocation1 [shape = 'u32[144,128]{1,0:T(1,128)}', space=vmem, size = 0x12000, scoped, tag = 'internal scratch']
  %s0 = inlined_call_operand.vmem [shape: f32[4,8], index: 0, kind: input, shape index: {}]
  %s1 = inlined_call_operand.vmem [shape: f32[11,4], index: 1, kind: input, shape index: {}]
  %s2 = inlined_call_operand.vmem [shape: f32[5,2], index: 2, kind: input, shape index: {}]
  %s3 = inlined_call_operand.vmem [shape: f32[4,2], index: 3, kind: output, shape index: {}]
  %s4 = sld [smem:[#allocation0]]
  $region22: #{tpu_custom_call.1} parent=0
    _
  %s6 = ssub.s32 1, %s4
  %s7 = scalar_select 0, %s6, %s4
  // Predicated region
  $region2: #{tpu_custom_call.1} parent=0 // pred_check
    _
  $region3: #{tpu_custom_call.1} parent=0 // pred_check_branch
    %9 = sbr.rel (0) target = $region5
  $region4: #{tpu_custom_call.1} parent=0 // pred_region
    _
  $region5: #{tpu_custom_call.1} parent=0 // pred_fallthru
    _
  // Predicated region
  $region6: #{tpu_custom_call.1} parent=0 // pred_check
    _
  $region7: #{tpu_custom_call.1} parent=0 // pred_check_branch
    %11 = sbr.rel (0) target = $region9
  $region8: #{tpu_custom_call.1} parent=0 // pred_region
    _
  $region9: #{tpu_custom_call.1} parent=0 // pred_fallthru
    _
  // Predicated region
  $region10: #{tpu_custom_call.1} parent=0 // pred_check
    _
  $region11: #{tpu_custom_call.1} parent=0 // pred_check_branch
    %13 = sbr.rel (0) target = $region13
  $region12: #{tpu_custom_call.1} parent=0 // pred_region
    _
  $region13: #{tpu_custom_call.1} parent=0 // pred_fallthru
    _
  %v14 = vld [vmem:[%s0] sm:$0xf]
  %v15 = vld [vmem:[%s1] sm:$0xff]
  %v16 = vld [vmem:[%s1 + $0x8] sm:$0x1]
  %v17 = vld [vmem:[%s1 + $0x9] sm:$0x1]
  %v18 = vld [vmem:[%s1 + $0xa] sm:$0x1]
  %v19 = vlaneseq
  %v20 = vshrl.u32 %v19, 7
  %v21 = vsub.s32 0, %v20
  %v22 = vrot.slane %v16, %v21
  %vm23 = vcmask 64512
  %v25 = vsel %vm23, %v14, 0
  %27 = vmatprep.subr.mxu0 0.0
  %28 = vmatpush1.msra.mxu0 0.0
  %29 = vmatprep.subr.mxu0 0.0
  %30 = vmatpush1.msra.mxu0 0.0
  %31 = vmatprep.subr.mxu0 0.0
  %32 = vmatpush1.msra.mxu0 0.0
  %33 = vmatprep.subr.mxu0 0.0
  %34 = vmatpush1.msra.mxu0 0.0
  %35 = vmatprep.subr.mxu0 0.0
  %36 = vmatpush1.msra.mxu0 0.0
  %37 = vmatprep.subr.mxu0 0.0
  %38 = vmatpush1.msra.mxu0 0.0
  %39 = vmatprep.subr.mxu0 0.0
  %40 = vmatpush1.msra.mxu0 0.0
  %41 = vmatprep.subr.mxu0 0.0
  %42 = vmatpush1.msra.mxu0 0.0
  %43 = vmatprep.subr.mxu0 0.0
  %44 = vmatpush1.msra.mxu0 0.0
  %45 = vmatprep.subr.mxu0 0.0
  %46 = vmatpush1.msra.mxu0 0.0
  %47 = vmatprep.subr.mxu0 0.0
  %48 = vmatpush1.msra.mxu0 0.0
  %49 = vmatprep.subr.mxu0 0.0
  %50 = vmatpush1.msra.mxu0 0.0
  %51 = vmatprep.subr.mxu0 0.0
  %52 = vmatpush1.msra.mxu0 0.0
  %53 = vmatprep.subr.mxu0 0.0
  %54 = vmatpush1.msra.mxu0 0.0
  %55 = vmatprep.subr.mxu0 0.0
  %56 = vmatpush1.msra.mxu0 0.0
  %57 = vmatprep.subr.mxu0 0.0
  %58 = vmatpush1.msra.mxu0 %v15
  %59 = vmatprep.subr.mxu0 0.0
  %60 = vmatpush2.msra.mxu0 0.0
  %61 = vmatprep.subr.mxu0 0.0
  %62 = vmatpush2.msra.mxu0 0.0
  %63 = vmatprep.subr.mxu0 0.0
  %64 = vmatpush2.msra.mxu0 0.0
  %65 = vmatprep.subr.mxu0 0.0
  %66 = vmatpush2.msra.mxu0 0.0
  %67 = vmatprep.subr.mxu0 0.0
  %68 = vmatpush2.msra.mxu0 0.0
  %69 = vmatprep.subr.mxu0 0.0
  %70 = vmatpush2.msra.mxu0 0.0
  %71 = vmatprep.subr.mxu0 0.0
  %72 = vmatpush2.msra.mxu0 0.0
  %73 = vmatprep.subr.mxu0 0.0
  %74 = vmatpush2.msra.mxu0 0.0
  %75 = vmatprep.subr.mxu0 0.0
  %76 = vmatpush2.msra.mxu0 0.0
  %77 = vmatprep.subr.mxu0 0.0
  %78 = vmatpush2.msra.mxu0 0.0
  %79 = vmatprep.subr.mxu0 0.0
  %80 = vmatpush2.msra.mxu0 0.0
  %81 = vmatprep.subr.mxu0 0.0
  %82 = vmatpush2.msra.mxu0 0.0
  %83 = vmatprep.subr.mxu0 0.0
  %84 = vmatpush2.msra.mxu0 0.0
  %85 = vmatprep.subr.mxu0 0.0
  %86 = vmatpush2.msra.mxu0 0.0
  %87 = vmatprep.subr.mxu0 0.0
  %88 = vmatpush2.msra.mxu0 0.0
  %89 = vmatprep.subr.mxu0 0.0
  %90 = vmatpush2.msra.mxu0 0.0
  %91 = vmatprep.mubr.f32.mxu0 0.0
  %92 = vmatmul.mubr.f32.gmra.mxu0 %v25
  %v93 = vpop.f32.mrf.mxu0
  %v94 = vadd.f32 %v22, %v93
  %v95 = vpop.f32.mrf.mxu0
  %96 = vdwg.mxu0
  %vm97 = vcmask 27648
  %v98 = vsel %vm97, %v94, 0.0
  %v99 = vrot.slane %v98, 4
  %v100 = vadd.f32 %v98, %v99
  %v101 = vrot.slane %v100, 2
  %v102 = vadd.f32 %v100, %v101
  %v103 = vrot.slane %v102, 1
  %v104 = vadd.f32 %v102, %v103
  %v105 = vmul.f32 %v104, 0.25
  %v106 = vsub.f32 %v94, %v105
  %v107 = vmul.f32 %v106, %v106
  %v108 = vsel %vm97, %v107, 0.0
  %v109 = vrot.slane %v108, 4
  %v110 = vadd.f32 %v108, %v109
  %v111 = vrot.slane %v110, 2
  %v112 = vadd.f32 %v110, %v111
  %v113 = vrot.slane %v112, 1
  %v114 = vadd.f32 %v112, %v113
  %v115 = vmul.f32 %v114, 0.25
  %v116 = vadd.f32 %v115, 1e-05
  %v117 = vrsqrt.pop %v116
  %v118 = vmul.f32 %v106, %v117
  %v119 = vlaneseq
  %v120 = vshrl.u32 %v119, 7
  %v121 = vsub.s32 0, %v120
  %v122 = vrot.slane %v17, %v121
  %v123 = vmul.f32 %v118, %v122
  %v124 = vlaneseq
  %v125 = vshrl.u32 %v124, 7
  %v126 = vsub.s32 0, %v125
  %v127 = vrot.slane %v18, %v126
  %v128 = vadd.f32 %v123, %v127
  %v129 = vld [vmem:[%s2] sm:$0xf]
  %v130 = vld [vmem:[%s2 + $0x4] sm:$0x1]
  %v131 = vlaneseq
  %v132 = vshrl.u32 %v131, 7
  %v133 = vsub.s32 0, %v132
  %v134 = vrot.slane %v130, %v133
  %vm135 = vcmask 31744
  %v137 = vsel %vm135, %v128, 0
  %vm139 = vcmask 1043456
  %v141 = vsel %vm139, %v129, 0
  %143 = vmatprep.subr.mxu0 0.0
  %144 = vmatpush1.msra.mxu0 0.0
  %145 = vmatprep.subr.mxu0 0.0
  %146 = vmatpush1.msra.mxu0 0.0
  %147 = vmatprep.subr.mxu0 0.0
  %148 = vmatpush1.msra.mxu0 0.0
  %149 = vmatprep.subr.mxu0 0.0
  %150 = vmatpush1.msra.mxu0 0.0
  %151 = vmatprep.subr.mxu0 0.0
  %152 = vmatpush1.msra.mxu0 0.0
  %153 = vmatprep.subr.mxu0 0.0
  %154 = vmatpush1.msra.mxu0 0.0
  %155 = vmatprep.subr.mxu0 0.0
  %156 = vmatpush1.msra.mxu0 0.0
  %157 = vmatprep.subr.mxu0 0.0
  %158 = vmatpush1.msra.mxu0 0.0
  %159 = vmatprep.subr.mxu0 0.0
  %160 = vmatpush1.msra.mxu0 0.0
  %161 = vmatprep.subr.mxu0 0.0
  %162 = vmatpush1.msra.mxu0 0.0
  %163 = vmatprep.subr.mxu0 0.0
  %164 = vmatpush1.msra.mxu0 0.0
  %165 = vmatprep.subr.mxu0 0.0
  %166 = vmatpush1.msra.mxu0 0.0
  %167 = vmatprep.subr.mxu0 0.0
  %168 = vmatpush1.msra.mxu0 0.0
  %169 = vmatprep.subr.mxu0 0.0
  %170 = vmatpush1.msra.mxu0 0.0
  %171 = vmatprep.subr.mxu0 0.0
  %172 = vmatpush1.msra.mxu0 0.0
  %173 = vmatprep.subr.mxu0 0.0
  %174 = vmatpush1.msra.mxu0 %v141
  %175 = vmatprep.subr.mxu0 0.0
  %176 = vmatpush2.msra.mxu0 0.0
  %177 = vmatprep.subr.mxu0 0.0
  %178 = vmatpush2.msra.mxu0 0.0
  %179 = vmatprep.subr.mxu0 0.0
  %180 = vmatpush2.msra.mxu0 0.0
  %181 = vmatprep.subr.mxu0 0.0
  %182 = vmatpush2.msra.mxu0 0.0
  %183 = vmatprep.subr.mxu0 0.0
  %184 = vmatpush2.msra.mxu0 0.0
  %185 = vmatprep.subr.mxu0 0.0
  %186 = vmatpush2.msra.mxu0 0.0
  %187 = vmatprep.subr.mxu0 0.0
  %188 = vmatpush2.msra.mxu0 0.0
  %189 = vmatprep.subr.mxu0 0.0
  %190 = vmatpush2.msra.mxu0 0.0
  %191 = vmatprep.subr.mxu0 0.0
  %192 = vmatpush2.msra.mxu0 0.0
  %193 = vmatprep.subr.mxu0 0.0
  %194 = vmatpush2.msra.mxu0 0.0
  %195 = vmatprep.subr.mxu0 0.0
  %196 = vmatpush2.msra.mxu0 0.0
  %197 = vmatprep.subr.mxu0 0.0
  %198 = vmatpush2.msra.mxu0 0.0
  %199 = vmatprep.subr.mxu0 0.0
  %200 = vmatpush2.msra.mxu0 0.0
  %201 = vmatprep.subr.mxu0 0.0
  %202 = vmatpush2.msra.mxu0 0.0
  %203 = vmatprep.subr.mxu0 0.0
  %204 = vmatpush2.msra.mxu0 0.0
  %205 = vmatprep.subr.mxu0 0.0
  %206 = vmatpush2.msra.mxu0 0.0
  %207 = vmatprep.mubr.f32.mxu0 0.0
  %208 = vmatmul.mubr.f32.gmra.mxu0 %v137
  %v209 = vpop.f32.mrf.mxu0
  %v210 = vadd.f32 %v134, %v209
  %v211 = vpop.f32.mrf.mxu0
  %212 = vdwg.mxu0
  %vm213 = vcmask 11264
  %214 = vst.msk [vmem:[%s3] sm:$0xf] %vm213, %v210
  // Predicated region
  $region14: #{tpu_custom_call.1} parent=0 // pred_check
    _
  $region15: #{tpu_custom_call.1} parent=0 // pred_check_branch
    %216 = sbr.rel (0) target = $region17
  $region16: #{tpu_custom_call.1} parent=0 // pred_region
    _
  $region17: #{tpu_custom_call.1} parent=0 // pred_fallthru
    _
  // Predicated region
  $region18: #{tpu_custom_call.1} parent=0 // pred_check
    _
  $region19: #{tpu_custom_call.1} parent=0 // pred_check_branch
    %218 = sbr.rel (0) target = $region21
  $region20: #{tpu_custom_call.1} parent=0 // pred_region
    _
  $region21: #{tpu_custom_call.1} parent=0 // pred_fallthru
    _

</llo_original>
